<compile_context>
chip_gen: v7x
topology: tpu7x:2x2x1
jax: 0.10.0
libtpu: 0.0.40
codegen_flags: <defaults>
</compile_context>

<pallas_src>
import functools
import math

import jax
import jax.numpy as jnp
from jax.experimental import pallas as pl
from jax.experimental.pallas import tpu as pltpu


# --------------------------------------------------------------------------- #
# Kernels
# --------------------------------------------------------------------------- #
def _qkv_attention_kernel(valid_ref, x_ref, wqkv_ref, o_ref, *, num_heads, head_dim):
    # valid_ref: SMEM [B] int32 (scalar prefetch)
    # x_ref:     [1, T, D] block for the current batch element
    # wqkv_ref:  [D, 3D]   resident fused projection weight
    # o_ref:     [1, T, D] head-concatenated attention context
    b = pl.program_id(0)
    d = num_heads * head_dim

    x = x_ref[0]                                                       # [T, D]
    qkv = jnp.dot(x, wqkv_ref[...], preferred_element_type=jnp.float32)  # [T, 3D]
    q = qkv[:, :d] * jnp.float32(1.0 / math.sqrt(head_dim))
    k = qkv[:, d:2 * d]
    v = qkv[:, 2 * d:]

    t = x.shape[0]
    vl = valid_ref[b]
    col = jax.lax.broadcasted_iota(jnp.int32, (t, t), 1)
    mask = col < vl            # masked_softmax: key positions >= valid_len -> -1e6

    outs = []
    for h in range(num_heads):                       # static unroll over heads
        sl = slice(h * head_dim, (h + 1) * head_dim)
        s = jax.lax.dot_general(q[:, sl], k[:, sl], (((1,), (1,)), ((), ())),
                                preferred_element_type=jnp.float32)    # [T, T]
        s = jnp.where(mask, s, jnp.float32(-1e6))
        m = jnp.max(s, axis=-1, keepdims=True)
        p = jnp.exp(s - m)
        inv = pl.reciprocal(jnp.sum(p, axis=-1, keepdims=True), approx=True)
        attn = p * inv
        outs.append(jnp.dot(attn, v[:, sl], preferred_element_type=jnp.float32))

    o_ref[0] = jnp.concatenate(outs, axis=-1).astype(o_ref.dtype)      # [T, D]


def _layernorm(s, g, b):
    mean = jnp.mean(s, axis=-1, keepdims=True)
    c = s - mean
    var = jnp.mean(c * c, axis=-1, keepdims=True)
    return c * jax.lax.rsqrt(var + jnp.float32(1e-5)) * g + b


def _out_ffn_kernel(attn_ref, x_ref, wo_ref, g1_ref, b1_ref,
                    w1_ref, bf1_ref, w2_ref, bf2_ref, g2_ref, b2_ref, o_ref):
    # Fused: W_o projection -> AddNorm1 -> dense1 -> ReLU -> dense2 -> AddNorm2.
    o = jnp.dot(attn_ref[...], wo_ref[...], preferred_element_type=jnp.float32)
    y1 = _layernorm(x_ref[...] + o, g1_ref[...], b1_ref[...])
    h = jnp.dot(y1, w1_ref[...], preferred_element_type=jnp.float32) + bf1_ref[...]
    h = jnp.maximum(h, 0.0)
    f = jnp.dot(h, w2_ref[...], preferred_element_type=jnp.float32) + bf2_ref[...]
    o_ref[...] = _layernorm(y1 + f, g2_ref[...], b2_ref[...]).astype(o_ref.dtype)


# --------------------------------------------------------------------------- #
# Wrappers (pallas_call plumbing)
# --------------------------------------------------------------------------- #
def qkv_attention(x, wqkv, valid_lens, *, num_heads):
    """x: [B, T, D], wqkv: [D, 3D], valid_lens: [B] int32 -> context [B, T, D]."""
    b, t, d = x.shape
    kern = functools.partial(_qkv_attention_kernel,
                             num_heads=num_heads, head_dim=d // num_heads)
    xspec = pl.BlockSpec((1, t, d), lambda i, vl: (i, 0, 0))
    return pl.pallas_call(
        kern,
        out_shape=jax.ShapeDtypeStruct((b, t, d), jnp.float32),
        grid_spec=pltpu.PrefetchScalarGridSpec(
            num_scalar_prefetch=1,
            grid=(b,),
            in_specs=[xspec,
                      pl.BlockSpec((d, 3 * d), lambda i, vl: (0, 0))],
            out_specs=xspec,
        ),
        compiler_params=pltpu.CompilerParams(dimension_semantics=("parallel",)),
    )(valid_lens.astype(jnp.int32), x, wqkv)


def out_proj_addnorm_ffn(attn2d, x2d, wo, g1, bt1, w1, bf1, w2, bf2, g2, bt2):
    """Fused W_o + AddNorm1 + FFN + AddNorm2.  attn2d/x2d: [M, D]."""
    m, d = x2d.shape
    f = w1.shape[1]
    # Full block for small problems; 256-row tiles otherwise (keeps the resident
    # weights + [tm, F] FFN intermediate well inside the default VMEM budget).
    tm = m if m <= 256 else 256
    row = pl.BlockSpec((tm, d), lambda i: (i, 0))

    def full(shape):
        return pl.BlockSpec(shape, lambda i: (0, 0))

    return pl.pallas_call(
        _out_ffn_kernel,
        out_shape=jax.ShapeDtypeStruct((m, d), jnp.float32),
        grid_spec=pl.GridSpec(
            grid=(pl.cdiv(m, tm),),
            in_specs=[row, row,
                      full((d, d)), full((1, d)), full((1, d)),
                      full((d, f)), full((1, f)),
                      full((f, d)), full((1, d)),
                      full((1, d)), full((1, d))],
            out_specs=row,
        ),
        compiler_params=pltpu.CompilerParams(dimension_semantics=("parallel",)),
    )(attn2d, x2d, wo, g1.reshape(1, d), bt1.reshape(1, d),
      w1, bf1.reshape(1, f), w2, bf2.reshape(1, d),
      g2.reshape(1, d), bt2.reshape(1, d))


def transformer_encoder_block_forward(x, valid_lens, params):
    """Forward pass of TransformerEncoderBlock (inference; dropout = identity).

    x:          [B, T, D] float32
    valid_lens: [B] int32 or None
    params:     dict of PyTorch-layout weights (see __main__)
    returns     [B, T, D] float32
    """
    # TODO(synk): dropout (attention weights + AddNorm) omitted — identity in eval mode.
    # TODO(synk): 2-D per-query valid_lens path of masked_softmax not supported (1-D per-batch only).
    b, t, d = x.shape
    h = params["num_heads"]
    if valid_lens is None:
        valid_lens = jnp.full((b,), t, dtype=jnp.int32)

    # Fused QKV weight (one lane-dense [D, 3D] matmul inside the attention kernel).
    wqkv = jnp.concatenate(
        [params["Wq"].T, params["Wk"].T, params["Wv"].T], axis=1)      # [D, 3D]

    attn = qkv_attention(x, wqkv, valid_lens, num_heads=h)             # [B, T, D]

    y2 = out_proj_addnorm_ffn(
        attn.reshape(b * t, d), x.reshape(b * t, d),
        params["Wo"].T, params["gamma1"], params["beta1"],
        params["W1"].T, params["b1"], params["W2"].T, params["b2"],
        params["gamma2"], params["beta2"])
    return y2.reshape(b, t, d)


# --------------------------------------------------------------------------- #
# Pure-JAX reference (mirrors the PyTorch module in eval mode)
# --------------------------------------------------------------------------- #
def _reference_forward(x, valid_lens, params):
    b, t, d = x.shape
    h = params["num_heads"]
    dh = d // h

    def lin(a, w):
        return a @ w.T

    q, k, v = lin(x, params["Wq"]), lin(x, params["Wk"]), lin(x, params["Wv"])

    def heads(a):
        return a.reshape(b, t, h, dh).transpose(0, 2, 1, 3)

    qh, kh, vh = heads(q), heads(k), heads(v)
    scores = jnp.einsum("bhtd,bhsd->bhts", qh, kh) / math.sqrt(dh)
    col = jnp.arange(t)[None, None, None, :]
    mask = col < valid_lens[:, None, None, None]
    scores = jnp.where(mask, scores, -1e6)
    attw = jax.nn.softmax(scores, axis=-1)
    attn = jnp.einsum("bhts,bhsd->bhtd", attw, vh)
    attn = attn.transpose(0, 2, 1, 3).reshape(b, t, d)
    o = lin(attn, params["Wo"])

    def ln(z, g, bt):
        mu = z.mean(-1, keepdims=True)
        var = ((z - mu) ** 2).mean(-1, keepdims=True)
        return (z - mu) / jnp.sqrt(var + 1e-5) * g + bt

    y1 = ln(x + o, params["gamma1"], params["beta1"])
    ff = lin(jax.nn.relu(lin(y1, params["W1"]) + params["b1"]), params["W2"]) + params["b2"]
    return ln(y1 + ff, params["gamma2"], params["beta2"])


# --------------------------------------------------------------------------- #
if __name__ == "__main__":
    key = jax.random.PRNGKey(0)
    ks = jax.random.split(key, 8)

    B, T, D, H, F = 2, 8, 32, 4, 64   # batch, seq, num_hiddens, num_heads, ffn_num_hiddens
    sd = 1.0 / math.sqrt(D)
    sf = 1.0 / math.sqrt(F)

    X = jax.random.normal(ks[0], (B, T, D), dtype=jnp.float32)
    valid_lens = jnp.array([6, 8], dtype=jnp.int32)

    params = {
        "num_heads": H,
        # MHA projections (use_bias=False), PyTorch layout [out, in]
        "Wq": sd * jax.random.normal(ks[1], (D, D), dtype=jnp.float32),
        "Wk": sd * jax.random.normal(ks[2], (D, D), dtype=jnp.float32),
        "Wv": sd * jax.random.normal(ks[3], (D, D), dtype=jnp.float32),
        "Wo": sd * jax.random.normal(ks[4], (D, D), dtype=jnp.float32),
        # FFN: dense1 [F, D] + bias [F], dense2 [D, F] + bias [D]
        "W1": sd * jax.random.normal(ks[5], (F, D), dtype=jnp.float32),
        "b1": jnp.zeros((F,), dtype=jnp.float32),
        "W2": sf * jax.random.normal(ks[6], (D, F), dtype=jnp.float32),
        "b2": jnp.zeros((D,), dtype=jnp.float32),
        # LayerNorm affine params (PyTorch init: gamma=1, beta=0)
        "gamma1": jnp.ones((D,), dtype=jnp.float32),
        "beta1": jnp.zeros((D,), dtype=jnp.float32),
        "gamma2": jnp.ones((D,), dtype=jnp.float32),
        "beta2": jnp.zeros((D,), dtype=jnp.float32),
    }

    y = transformer_encoder_block_forward(X, valid_lens, params)
    jax.block_until_ready(y)

    y_ref = _reference_forward(X, valid_lens, params)
    assert y.shape == (B, T, D)
    assert jnp.allclose(y, y_ref, atol=1e-2, rtol=1e-2), "mismatch vs reference"

    print("KERNEL_OK")
</pallas_src>

<mosaic_0001>
module attributes {stable_mosaic.version = 11 : i64} {
  func.func @_qkv_attention_kernel(%arg0: i32, %arg1: memref<2xi32, #tpu.memory_space<smem>>, %arg2: memref<1x8x32xf32, #tpu.memory_space<vmem>>, %arg3: memref<32x96xf32, #tpu.memory_space<vmem>>, %arg4: memref<1x8x32xf32, #tpu.memory_space<vmem>>) attributes {dimension_semantics = [#tpu.dimension_semantics<parallel>], iteration_bounds = array<i64: 2>, scalar_prefetch = 1 : i64, scratch_operands = 0 : i64, tpu.core_type = #tpu.core_type<tc>, window_params = [{transform_indices = @transform_0, window_bounds = array<i64: 1, 8, 32>}, {pipeline_mode = #tpu.pipeline_mode<synchronous>, transform_indices = @transform_1, window_bounds = array<i64: 32, 96>}, {transform_indices = @transform_2, window_bounds = array<i64: 1, 8, 32>}]} {
    %c0 = arith.constant 0 : index
    %c0_0 = arith.constant 0 : index
    %c0_1 = arith.constant 0 : index
    %0 = vector.load %arg2[%c0, %c0_0, %c0_1] : memref<1x8x32xf32, #tpu.memory_space<vmem>>, vector<1x8x32xf32>
    %1 = vector.shape_cast %0 : vector<1x8x32xf32> to vector<8x32xf32>
    %c0_2 = arith.constant 0 : index
    %c0_3 = arith.constant 0 : index
    %2 = vector.load %arg3[%c0_2, %c0_3] : memref<32x96xf32, #tpu.memory_space<vmem>>, vector<32x96xf32>
    %cst = arith.constant dense<0.000000e+00> : vector<8x96xf32>
    %3 = tpu.matmul %1, %2, %cst {dimension_numbers = #tpu.dot_dimension_numbers<[1], [0], [0], [1], [0, 0, 1, 1], [], []>} : vector<8x32xf32>, vector<32x96xf32>, vector<8x96xf32> -> vector<8x96xf32>
    %4 = vector.extract_strided_slice %3 {offsets = [0, 0], sizes = [8, 32], strides = [1, 1]} : vector<8x96xf32> to vector<8x32xf32>
    %cst_4 = arith.constant 0.353553385 : f32
    %5 = vector.broadcast %cst_4 : f32 to vector<8x32xf32>
    %6 = arith.mulf %4, %5 : vector<8x32xf32>
    %7 = vector.extract_strided_slice %3 {offsets = [0, 32], sizes = [8, 32], strides = [1, 1]} : vector<8x96xf32> to vector<8x32xf32>
    %8 = vector.extract_strided_slice %3 {offsets = [0, 64], sizes = [8, 32], strides = [1, 1]} : vector<8x96xf32> to vector<8x32xf32>
    %9 = arith.index_cast %arg0 : i32 to index
    %10 = memref.load %arg1[%9] : memref<2xi32, #tpu.memory_space<smem>>
    %11 = tpu.iota {dimensions = array<i32: 1>} : vector<8x8xi32>
    %12 = vector.broadcast %10 : i32 to vector<8x8xi32>
    %13 = arith.cmpi slt, %11, %12 : vector<8x8xi32>
    %14 = vector.extract_strided_slice %6 {offsets = [0, 0], sizes = [8, 8], strides = [1, 1]} : vector<8x32xf32> to vector<8x8xf32>
    %15 = vector.extract_strided_slice %7 {offsets = [0, 0], sizes = [8, 8], strides = [1, 1]} : vector<8x32xf32> to vector<8x8xf32>
    %cst_5 = arith.constant dense<0.000000e+00> : vector<8x8xf32>
    %16 = tpu.matmul %14, %15, %cst_5 {dimension_numbers = #tpu.dot_dimension_numbers<[1], [1], [0], [0], [0, 0, 1, 0], [], []>} : vector<8x8xf32>, vector<8x8xf32>, vector<8x8xf32> -> vector<8x8xf32>
    %cst_6 = arith.constant -1.000000e+06 : f32
    %17 = vector.broadcast %cst_6 : f32 to vector<8x8xf32>
    %18 = arith.select %13, %16, %17 : vector<8x8xi1>, vector<8x8xf32>
    %cst_7 = arith.constant dense<0xFF800000> : vector<8xf32>
    %19 = vector.multi_reduction <maximumf>, %18, %cst_7 [1] : vector<8x8xf32> to vector<8xf32>
    %20 = vector.shape_cast %19 : vector<8xf32> to vector<8x1xf32>
    %21 = vector.broadcast %20 : vector<8x1xf32> to vector<8x8xf32>
    %22 = arith.subf %18, %21 : vector<8x8xf32>
    %23 = math.exp %22 : vector<8x8xf32>
    %cst_8 = arith.constant dense<0.000000e+00> : vector<8xf32>
    %24 = vector.multi_reduction <add>, %23, %cst_8 [1] : vector<8x8xf32> to vector<8xf32>
    %25 = vector.shape_cast %24 : vector<8xf32> to vector<8x1xf32>
    %26 = tpu.reciprocal %25 {approx = true} : vector<8x1xf32> -> vector<8x1xf32>
    %27 = vector.broadcast %26 : vector<8x1xf32> to vector<8x8xf32>
    %28 = arith.mulf %23, %27 : vector<8x8xf32>
    %29 = vector.extract_strided_slice %8 {offsets = [0, 0], sizes = [8, 8], strides = [1, 1]} : vector<8x32xf32> to vector<8x8xf32>
    %cst_9 = arith.constant dense<0.000000e+00> : vector<8x8xf32>
    %30 = tpu.matmul %28, %29, %cst_9 {dimension_numbers = #tpu.dot_dimension_numbers<[1], [0], [0], [1], [0, 0, 1, 1], [], []>} : vector<8x8xf32>, vector<8x8xf32>, vector<8x8xf32> -> vector<8x8xf32>
    %31 = vector.extract_strided_slice %6 {offsets = [0, 8], sizes = [8, 8], strides = [1, 1]} : vector<8x32xf32> to vector<8x8xf32>
    %32 = vector.extract_strided_slice %7 {offsets = [0, 8], sizes = [8, 8], strides = [1, 1]} : vector<8x32xf32> to vector<8x8xf32>
    %cst_10 = arith.constant dense<0.000000e+00> : vector<8x8xf32>
    %33 = tpu.matmul %31, %32, %cst_10 {dimension_numbers = #tpu.dot_dimension_numbers<[1], [1], [0], [0], [0, 0, 1, 0], [], []>} : vector<8x8xf32>, vector<8x8xf32>, vector<8x8xf32> -> vector<8x8xf32>
    %cst_11 = arith.constant -1.000000e+06 : f32
    %34 = vector.broadcast %cst_11 : f32 to vector<8x8xf32>
    %35 = arith.select %13, %33, %34 : vector<8x8xi1>, vector<8x8xf32>
    %cst_12 = arith.constant dense<0xFF800000> : vector<8xf32>
    %36 = vector.multi_reduction <maximumf>, %35, %cst_12 [1] : vector<8x8xf32> to vector<8xf32>
    %37 = vector.shape_cast %36 : vector<8xf32> to vector<8x1xf32>
    %38 = vector.broadcast %37 : vector<8x1xf32> to vector<8x8xf32>
    %39 = arith.subf %35, %38 : vector<8x8xf32>
    %40 = math.exp %39 : vector<8x8xf32>
    %cst_13 = arith.constant dense<0.000000e+00> : vector<8xf32>
    %41 = vector.multi_reduction <add>, %40, %cst_13 [1] : vector<8x8xf32> to vector<8xf32>
    %42 = vector.shape_cast %41 : vector<8xf32> to vector<8x1xf32>
    %43 = tpu.reciprocal %42 {approx = true} : vector<8x1xf32> -> vector<8x1xf32>
    %44 = vector.broadcast %43 : vector<8x1xf32> to vector<8x8xf32>
    %45 = arith.mulf %40, %44 : vector<8x8xf32>
    %46 = vector.extract_strided_slice %8 {offsets = [0, 8], sizes = [8, 8], strides = [1, 1]} : vector<8x32xf32> to vector<8x8xf32>
    %cst_14 = arith.constant dense<0.000000e+00> : vector<8x8xf32>
    %47 = tpu.matmul %45, %46, %cst_14 {dimension_numbers = #tpu.dot_dimension_numbers<[1], [0], [0], [1], [0, 0, 1, 1], [], []>} : vector<8x8xf32>, vector<8x8xf32>, vector<8x8xf32> -> vector<8x8xf32>
    %48 = vector.extract_strided_slice %6 {offsets = [0, 16], sizes = [8, 8], strides = [1, 1]} : vector<8x32xf32> to vector<8x8xf32>
    %49 = vector.extract_strided_slice %7 {offsets = [0, 16], sizes = [8, 8], strides = [1, 1]} : vector<8x32xf32> to vector<8x8xf32>
    %cst_15 = arith.constant dense<0.000000e+00> : vector<8x8xf32>
    %50 = tpu.matmul %48, %49, %cst_15 {dimension_numbers = #tpu.dot_dimension_numbers<[1], [1], [0], [0], [0, 0, 1, 0], [], []>} : vector<8x8xf32>, vector<8x8xf32>, vector<8x8xf32> -> vector<8x8xf32>
    %cst_16 = arith.constant -1.000000e+06 : f32
    %51 = vector.broadcast %cst_16 : f32 to vector<8x8xf32>
    %52 = arith.select %13, %50, %51 : vector<8x8xi1>, vector<8x8xf32>
    %cst_17 = arith.constant dense<0xFF800000> : vector<8xf32>
    %53 = vector.multi_reduction <maximumf>, %52, %cst_17 [1] : vector<8x8xf32> to vector<8xf32>
    %54 = vector.shape_cast %53 : vector<8xf32> to vector<8x1xf32>
    %55 = vector.broadcast %54 : vector<8x1xf32> to vector<8x8xf32>
    %56 = arith.subf %52, %55 : vector<8x8xf32>
    %57 = math.exp %56 : vector<8x8xf32>
    %cst_18 = arith.constant dense<0.000000e+00> : vector<8xf32>
    %58 = vector.multi_reduction <add>, %57, %cst_18 [1] : vector<8x8xf32> to vector<8xf32>
    %59 = vector.shape_cast %58 : vector<8xf32> to vector<8x1xf32>
    %60 = tpu.reciprocal %59 {approx = true} : vector<8x1xf32> -> vector<8x1xf32>
    %61 = vector.broadcast %60 : vector<8x1xf32> to vector<8x8xf32>
    %62 = arith.mulf %57, %61 : vector<8x8xf32>
    %63 = vector.extract_strided_slice %8 {offsets = [0, 16], sizes = [8, 8], strides = [1, 1]} : vector<8x32xf32> to vector<8x8xf32>
    %cst_19 = arith.constant dense<0.000000e+00> : vector<8x8xf32>
    %64 = tpu.matmul %62, %63, %cst_19 {dimension_numbers = #tpu.dot_dimension_numbers<[1], [0], [0], [1], [0, 0, 1, 1], [], []>} : vector<8x8xf32>, vector<8x8xf32>, vector<8x8xf32> -> vector<8x8xf32>
    %65 = vector.extract_strided_slice %6 {offsets = [0, 24], sizes = [8, 8], strides = [1, 1]} : vector<8x32xf32> to vector<8x8xf32>
    %66 = vector.extract_strided_slice %7 {offsets = [0, 24], sizes = [8, 8], strides = [1, 1]} : vector<8x32xf32> to vector<8x8xf32>
    %cst_20 = arith.constant dense<0.000000e+00> : vector<8x8xf32>
    %67 = tpu.matmul %65, %66, %cst_20 {dimension_numbers = #tpu.dot_dimension_numbers<[1], [1], [0], [0], [0, 0, 1, 0], [], []>} : vector<8x8xf32>, vector<8x8xf32>, vector<8x8xf32> -> vector<8x8xf32>
    %cst_21 = arith.constant -1.000000e+06 : f32
    %68 = vector.broadcast %cst_21 : f32 to vector<8x8xf32>
    %69 = arith.select %13, %67, %68 : vector<8x8xi1>, vector<8x8xf32>
    %cst_22 = arith.constant dense<0xFF800000> : vector<8xf32>
    %70 = vector.multi_reduction <maximumf>, %69, %cst_22 [1] : vector<8x8xf32> to vector<8xf32>
    %71 = vector.shape_cast %70 : vector<8xf32> to vector<8x1xf32>
    %72 = vector.broadcast %71 : vector<8x1xf32> to vector<8x8xf32>
    %73 = arith.subf %69, %72 : vector<8x8xf32>
    %74 = math.exp %73 : vector<8x8xf32>
    %cst_23 = arith.constant dense<0.000000e+00> : vector<8xf32>
    %75 = vector.multi_reduction <add>, %74, %cst_23 [1] : vector<8x8xf32> to vector<8xf32>
    %76 = vector.shape_cast %75 : vector<8xf32> to vector<8x1xf32>
    %77 = tpu.reciprocal %76 {approx = true} : vector<8x1xf32> -> vector<8x1xf32>
    %78 = vector.broadcast %77 : vector<8x1xf32> to vector<8x8xf32>
    %79 = arith.mulf %74, %78 : vector<8x8xf32>
    %80 = vector.extract_strided_slice %8 {offsets = [0, 24], sizes = [8, 8], strides = [1, 1]} : vector<8x32xf32> to vector<8x8xf32>
    %cst_24 = arith.constant dense<0.000000e+00> : vector<8x8xf32>
    %81 = tpu.matmul %79, %80, %cst_24 {dimension_numbers = #tpu.dot_dimension_numbers<[1], [0], [0], [1], [0, 0, 1, 1], [], []>} : vector<8x8xf32>, vector<8x8xf32>, vector<8x8xf32> -> vector<8x8xf32>
    %82 = tpu.concatenate %30, %47, %64, %81 in 1 : vector<8x8xf32>, vector<8x8xf32>, vector<8x8xf32>, vector<8x8xf32> -> vector<8x32xf32>
    %c0_25 = arith.constant 0 : index
    %c0_26 = arith.constant 0 : index
    %c0_27 = arith.constant 0 : index
    %83 = vector.load %arg4[%c0_25, %c0_26, %c0_27] : memref<1x8x32xf32, #tpu.memory_space<vmem>>, vector<1x8x32xf32>
    %84 = vector.shape_cast %83 : vector<1x8x32xf32> to vector<8x32xf32>
    %85 = vector.shape_cast %82 : vector<8x32xf32> to vector<1x8x32xf32>
    tpu.vector_store %arg4[%c0_25, %c0_26, %c0_27], %85 {strides = array<i32>} : memref<1x8x32xf32, #tpu.memory_space<vmem>>, vector<1x8x32xf32>,
    return
  }
  func.func @transform_0(%arg0: i32, %arg1: memref<2xi32, #tpu.memory_space<smem>>) -> (i32, i32, i32) {
    %c0_i32 = arith.constant 0 : i32
    %c0_i32_0 = arith.constant 0 : i32
    %c0_i32_1 = arith.constant 0 : i32
    return %arg0, %c0_i32, %c0_i32_0 : i32, i32, i32
  }
  func.func @transform_1(%arg0: i32, %arg1: memref<2xi32, #tpu.memory_space<smem>>) -> (i32, i32) {
    %c0_i32 = arith.constant 0 : i32
    %c0_i32_0 = arith.constant 0 : i32
    %c0_i32_1 = arith.constant 0 : i32
    return %c0_i32, %c0_i32_0 : i32, i32
  }
  func.func @transform_2(%arg0: i32, %arg1: memref<2xi32, #tpu.memory_space<smem>>) -> (i32, i32, i32) {
    %c0_i32 = arith.constant 0 : i32
    %c0_i32_0 = arith.constant 0 : i32
    %c0_i32_1 = arith.constant 0 : i32
    return %arg0, %c0_i32, %c0_i32_0 : i32, i32, i32
  }
}

</mosaic_0001>

<llo_original>
// kernel: tpu_custom_call.1
$region0: #{tpu_custom_call.1}
  #allocation0 [shape = 'u32[]', space=smem, size = 0x4, offset = 0x4, fixed_abs, tag = 'smem constant byte address 0x4 - core index']
  #allocation1 [shape = 'u32[144,128]{1,0:T(1,128)}', space=vmem, size = 0x12000, scoped, tag = 'internal scratch']
  #allocation2 [shape = 's32[1]{0}', space=sflag, size = 0x4, scoped, tag = 'scoped memory for tpu_custom_call.1']
  #allocation3 [shape = 'u8[512]{0}', space=smem, size = 0x200, scoped, tag = 'prefetched SMEM operand 0']
  %s0 = inlined_call_operand.hbm [shape: s32[2], index: 0, kind: input, shape index: {}]
  %s1 = inlined_call_operand.hbm [shape: f32[2,8,32], index: 1, kind: input, shape index: {}]
  %s2 = inlined_call_operand.hbm [shape: f32[32,96], index: 2, kind: input, shape index: {}]
  %s3 = inlined_call_operand.hbm [shape: f32[2,8,32], index: 3, kind: output, shape index: {}]
  %s4 = sld [smem:[#allocation0]]
  $region49: #{tpu_custom_call.1} parent=0
    _
  %s6 = ssub.s32 1, %s4
  %s7 = scalar_select 0, %s6, %s4
  %9 = dma.hbm_to_smem %s0, 16, [#allocation3], [#allocation2]
  %10 = dma.done [#allocation2], 16
  %11 = sfence
  $region1: #{tpu_custom_call.1} parent=0
    #allocation4 [shape = 'u8[8192]{0}', space=vmem, size = 0x2000, scoped, tag = 'input window, operand 1']
    #allocation5 [shape = 's32[2]{0}', space=sflag, size = 0x8, scoped, tag = 'scoped memory for tpu_custom_call.1']
    #allocation6 [shape = 's32[2]{0}', space=sflag, size = 0x8, scoped, tag = 'scoped memory for tpu_custom_call.1']
    #allocation7 [shape = 'u8[16384]{0}', space=vmem, size = 0x4000, scoped, tag = 'input window, operand 2, single buffered']
    #allocation8 [shape = 's32[1]{0}', space=sflag, size = 0x4, scoped, tag = 'scoped memory for tpu_custom_call.1']
    #allocation9 [shape = 'u8[8192]{0}', space=vmem, size = 0x2000, scoped, tag = 'output window, operand 0']
    %12 = vsyncpa [#allocation5], 0
    %s13 = scalar_lea.sflag [#allocation5], 1
    %14 = vsyncpa %s13, 0
    %15 = vsyncpa [#allocation8], 0
    %16 = vsyncpa [#allocation6], 0
    %s17 = scalar_lea.sflag [#allocation6], 1
    %18 = vsyncpa %s17, 0
    loop: start=0, step=1, limit=4
    $region2: #{tpu_custom_call.1} parent=1 // loop_pre_header
      _
    $region3: #{tpu_custom_call.1} parent=1 // loop_header
      %s20 = sphi 0, %s24
      %p21 = scmp.ge.s32.totalorder %s20, 4
      %s30 = sphi 0, %s32
      %s33 = sphi 0, %s30
      %s34 = sphi 0, %s33
      %s50 = sphi 0, %s34
      %s54 = sphi 0, %s54
      %s56 = sphi 0, %s54
      %s57 = sphi 0, %s56
      %s71 = sphi 0, %s57
      %s77 = sphi 0, %s79
      %s80 = sphi 0, %s77
      %s81 = sphi 0, %s80
      %s97 = sphi 0, %s81
    $region4: #{tpu_custom_call.1} parent=1 // loop_header_branch
      %23 = sbr.rel (%p21) target = $region8
    $region5: #{tpu_custom_call.1} parent=1 // loop_body
      %s25 = ssub.s32 %s20, 1
      %s26 = ssub.s32 %s20, 2
      %s27 = sadd.s32 %s20, 1
      %s28 = ssub.s32 %s20, %s27
      %p29 = scmp.eq.s32.totalorder %s28, 0
      %s31 = sadd.s32 %s30, 1
      %s32 = scalar_select %p29, %s30, %s31
      %p35 = pneg %p29
      %p36 = scmp.eq.s32.totalorder %s20, 1
      %p37 = por %p35, %p36
      %p38 = scmp.ne.s32.totalorder %s30, %s33
      %p39 = scmp.eq.s32.totalorder %s20, 0
      %p40 = por %p38, %p39
      %p41 = scmp.ne.s32.totalorder %s30, %s33
      %p42 = scmp.eq.s32.totalorder %s25, 1
      %p43 = por %p41, %p42
      %p44 = scmp.ne.s32.totalorder %s33, %s34
      %p45 = scmp.eq.s32.totalorder %s25, 0
      %p46 = por %p44, %p45
      %p47 = scmp.ne.s32.totalorder %s33, %s34
      %p48 = scmp.eq.s32.totalorder %s26, 1
      %p49 = por %p47, %p48
      %p51 = scmp.ne.s32.totalorder %s34, %s50
      %p52 = scmp.eq.s32.totalorder %s26, 0
      %p53 = por %p51, %p52
      %s55 = sadd.s32 %s54, 1
      %p58 = scmp.eq.s32.totalorder %s20, 1
      %p59 = scmp.ne.s32.totalorder %s54, %s56
      %p60 = scmp.eq.s32.totalorder %s20, 0
      %p61 = por %p59, %p60
      %p62 = scmp.ne.s32.totalorder %s54, %s56
      %p63 = scmp.eq.s32.totalorder %s25, 1
      %p64 = por %p62, %p63
      %p65 = scmp.ne.s32.totalorder %s56, %s57
      %p66 = scmp.eq.s32.totalorder %s25, 0
      %p67 = por %p65, %p66
      %p68 = scmp.ne.s32.totalorder %s56, %s57
      %p69 = scmp.eq.s32.totalorder %s26, 1
      %p70 = por %p68, %p69
      %p72 = scmp.ne.s32.totalorder %s57, %s71
      %p73 = scmp.eq.s32.totalorder %s26, 0
      %p74 = por %p72, %p73
      %s75 = ssub.s32 %s20, %s27
      %p76 = scmp.eq.s32.totalorder %s75, 0
      %s78 = sadd.s32 %s77, 1
      %s79 = scalar_select %p76, %s77, %s78
      %p82 = pneg %p76
      %p83 = scmp.eq.s32.totalorder %s20, 1
      %p84 = por %p82, %p83
      %p85 = scmp.ne.s32.totalorder %s77, %s80
      %p86 = scmp.eq.s32.totalorder %s20, 0
      %p87 = por %p85, %p86
      %p88 = scmp.ne.s32.totalorder %s77, %s80
      %p89 = scmp.eq.s32.totalorder %s25, 1
      %p90 = por %p88, %p89
      %p91 = scmp.ne.s32.totalorder %s80, %s81
      %p92 = scmp.eq.s32.totalorder %s25, 0
      %p93 = por %p91, %p92
      %p94 = scmp.ne.s32.totalorder %s80, %s81
      %p95 = scmp.eq.s32.totalorder %s26, 1
      %p96 = por %p94, %p95
      %p98 = scmp.ne.s32.totalorder %s81, %s97
      %p99 = scmp.eq.s32.totalorder %s26, 0
      %p100 = por %p98, %p99
      %p101 = scmp.le.s32.totalorder 1, %s20
      %p102 = scmp.lt.s32.totalorder %s20, 3
      %p103 = pnand %p101, %p102
      %p104 = pneg %p103
      // Predicated region
      $region9: #{tpu_custom_call.1} parent=5 // pred_check
        _
      $region10: #{tpu_custom_call.1} parent=5 // pred_check_branch
        %106 = sbr.rel (%p103) target = $region12
      $region11: #{tpu_custom_call.1} parent=5 // pred_region
        %s107 = ssub.s32 %s20, 1
        // Predicated region
        $region13: #{tpu_custom_call.1} parent=11 // pred_check
          %p108 = pneg %p67
        $region14: #{tpu_custom_call.1} parent=11 // pred_check_branch
          %110 = sbr.rel (%p108) target = $region16
        $region15: #{tpu_custom_call.1} parent=11 // pred_region
          %s112 = ssub.s32 512, 512
          %113 = vsyncadd [#allocation8], %s112
          %s114 = sshll.u32 [#allocation7], 4
          %s115 = int_to_ptr.vmem [resolvable:$true] %s114
          %120 = dma.hbm_to_vmem [thread:$0]  %s2, 512, %s115, [#allocation8], 128, 128, 8
        $region16: #{tpu_custom_call.1} parent=11 // pred_fallthru
          _
      $region12: #{tpu_custom_call.1} parent=5 // pred_fallthru
        _
      %p121 = scmp.lt.s32.totalorder %s20, 2
      // Predicated region
      $region17: #{tpu_custom_call.1} parent=5 // pred_check
        %p122 = pneg %p121
      $region18: #{tpu_custom_call.1} parent=5 // pred_check_branch
        %124 = sbr.rel (%p122) target = $region20
      $region19: #{tpu_custom_call.1} parent=5 // pred_region
        // Predicated region
        $region21: #{tpu_custom_call.1} parent=19 // pred_check
          %p125 = pneg %p40
        $region22: #{tpu_custom_call.1} parent=19 // pred_check_branch
          %127 = sbr.rel (%p125) target = $region24
        $region23: #{tpu_custom_call.1} parent=19 // pred_region
          %s128 = sand.u32 %s30, 1
          %s129 = scalar_lea.sflag [#allocation5], %s128
          %s130 = sand.u32 %s30, 1
          %s131 = smul.addr %s130, 8
          %s132 = scalar_lea.vmem [#allocation4], %s131
          %s134 = ssub.s32 128, 128
          %135 = vsyncadd %s129, %s134
          %s136 = smul.addr %s20, 128
          %s137 = scalar_lea.hbm %s1, %s136
          %s139 = sshll.u32 %s132, 4
          %s140 = int_to_ptr.vmem [resolvable:$true] %s139
          %142 = dma.hbm_to_vmem [thread:$0]  %s137, 128, %s140, %s129
        $region24: #{tpu_custom_call.1} parent=19 // pred_fallthru
          _
      $region20: #{tpu_custom_call.1} parent=5 // pred_fallthru
        _
      %p143 = scmp.le.s32.totalorder 1, %s20
      %p144 = scmp.lt.s32.totalorder %s20, 3
      %p145 = pnand %p143, %p144
      %p146 = pneg %p145
      // Predicated region
      $region25: #{tpu_custom_call.1} parent=5 // pred_check
        _
      $region26: #{tpu_custom_call.1} parent=5 // pred_check_branch
        %148 = sbr.rel (%p145) target = $region28
      $region27: #{tpu_custom_call.1} parent=5 // pred_region
        %s149 = ssub.s32 %s20, 1
        %s150 = sand.u32 %s33, 1
        %s151 = scalar_lea.sflag [#allocation5], %s150
        %s152 = sand.u32 %s33, 1
        %s153 = smul.addr %s152, 8
        %s154 = scalar_lea.vmem [#allocation4], %s153
        // Predicated region
        $region29: #{tpu_custom_call.1} parent=27 // pred_check
          %p155 = pneg %p46
        $region30: #{tpu_custom_call.1} parent=27 // pred_check_branch
          %157 = sbr.rel (%p155) target = $region32
        $region31: #{tpu_custom_call.1} parent=27 // pred_region
          %158 = dma.done %s151, 128
        $region32: #{tpu_custom_call.1} parent=27 // pred_fallthru
          _
        // Predicated region
        $region33: #{tpu_custom_call.1} parent=27 // pred_check
          %p159 = pneg %p67
        $region34: #{tpu_custom_call.1} parent=27 // pred_check_branch
          %161 = sbr.rel (%p159) target = $region36
        $region35: #{tpu_custom_call.1} parent=27 // pred_region
          %162 = dma.done [#allocation8], 512
        $region36: #{tpu_custom_call.1} parent=27 // pred_fallthru
          _
        %s163 = sand.u32 %s33, 1
        %s164 = scalar_lea.sflag [#allocation5], %s163
        %s165 = sand.u32 %s33, 1
        %s166 = smul.addr %s165, 8
        %s167 = scalar_lea.vmem [#allocation4], %s166
        %p168 = pneg %p46
        %p169 = pneg %p43
        %p170 = pneg %p67
        %p171 = pneg %p64
        %p172 = pneg %p93
        %p173 = pneg %p90
        %s174 = sand.u32 %s80, 1
        %s175 = scalar_lea.sflag [#allocation6], %s174
        %s176 = sand.u32 %s80, 1
        %s177 = smul.addr %s176, 8
        %s178 = scalar_lea.vmem [#allocation9], %s177
        %v179 = vld [vmem:[%s154] sm:$0xff]
        %v180 = vld [vmem:[#allocation7] sm:$0xff]
        %v181 = vld [vmem:[#allocation7 + $0x8] sm:$0xff]
        %v182 = vld [vmem:[#allocation7 + $0x10] sm:$0xff]
        %v183 = vld [vmem:[#allocation7 + $0x18] sm:$0xff]
        %vm184 = vcmask 261120
        %v186 = vsel %vm184, %v179, 0
        %188 = vmatprep.subr.mxu0 0.0
        %189 = vmatpush1.msra.mxu0 %v180
        %190 = vmatprep.subr.mxu0 0.0
        %191 = vmatpush1.msra.mxu0 %v181
        %192 = vmatprep.subr.mxu0 0.0
        %193 = vmatpush1.msra.mxu0 %v182
        %194 = vmatprep.subr.mxu0 0.0
        %195 = vmatpush1.msra.mxu0 %v183
        %196 = vmatprep.subr.mxu0 0.0
        %197 = vmatpush1.msra.mxu0 0.0
        %198 = vmatprep.subr.mxu0 0.0
        %199 = vmatpush1.msra.mxu0 0.0
        %200 = vmatprep.subr.mxu0 0.0
        %201 = vmatpush1.msra.mxu0 0.0
        %202 = vmatprep.subr.mxu0 0.0
        %203 = vmatpush1.msra.mxu0 0.0
        %204 = vmatprep.subr.mxu0 0.0
        %205 = vmatpush1.msra.mxu0 0.0
        %206 = vmatprep.subr.mxu0 0.0
        %207 = vmatpush1.msra.mxu0 0.0
        %208 = vmatprep.subr.mxu0 0.0
        %209 = vmatpush1.msra.mxu0 0.0
        %210 = vmatprep.subr.mxu0 0.0
        %211 = vmatpush1.msra.mxu0 0.0
        %212 = vmatprep.subr.mxu0 0.0
        %213 = vmatpush1.msra.mxu0 0.0
        %214 = vmatprep.subr.mxu0 0.0
        %215 = vmatpush1.msra.mxu0 0.0
        %216 = vmatprep.subr.mxu0 0.0
        %217 = vmatpush1.msra.mxu0 0.0
        %218 = vmatprep.subr.mxu0 0.0
        %219 = vmatpush1.msra.mxu0 0.0
        %220 = vmatprep.subr.mxu0 0.0
        %221 = vmatpush1.msra.mxu0 0.0
        %222 = vmatprep.subr.mxu0 0.0
        %223 = vmatpush1.msra.mxu0 0.0
        %224 = vmatprep.subr.mxu0 0.0
        %225 = vmatpush1.msra.mxu0 0.0
        %226 = vmatprep.subr.mxu0 0.0
        %227 = vmatpush1.msra.mxu0 0.0
        %228 = vmatprep.subr.mxu0 0.0
        %229 = vmatpush1.msra.mxu0 0.0
        %230 = vmatprep.subr.mxu0 0.0
        %231 = vmatpush1.msra.mxu0 0.0
        %232 = vmatprep.subr.mxu0 0.0
        %233 = vmatpush1.msra.mxu0 0.0
        %234 = vmatprep.subr.mxu0 0.0
        %235 = vmatpush1.msra.mxu0 0.0
        %236 = vmatprep.subr.mxu0 0.0
        %237 = vmatpush1.msra.mxu0 0.0
        %238 = vmatprep.subr.mxu0 0.0
        %239 = vmatpush1.msra.mxu0 0.0
        %240 = vmatprep.subr.mxu0 0.0
        %241 = vmatpush1.msra.mxu0 0.0
        %242 = vmatprep.subr.mxu0 0.0
        %243 = vmatpush1.msra.mxu0 0.0
        %244 = vmatprep.subr.mxu0 0.0
        %245 = vmatpush1.msra.mxu0 0.0
        %246 = vmatprep.subr.mxu0 0.0
        %247 = vmatpush1.msra.mxu0 0.0
        %248 = vmatprep.subr.mxu0 0.0
        %249 = vmatpush1.msra.mxu0 0.0
        %250 = vmatprep.subr.mxu0 0.0
        %251 = vmatpush1.msra.mxu0 0.0
        %252 = vmatprep.mubr.f32.mxu0 0.0
        %253 = vmatmul.mubr.f32.gmra.mrb[0].mxu0 %v186
        %v254 = vpop.f32.mrb[0].mxu0
        %v255 = vadd.f32 0.0, %v254
        %v256 = vpop.f32.mrb[0].mxu0
        %257 = vdwg.mxu0
        %v258 = vmul.f32 %v255, 0.35355338
        %s259 = sld [smem:[#allocation3 + %s25]]
        %v260 = vlaneseq
        %v261 = vand.u32 %v260, 127
        %v262 = vstv %s259
        %vm263 = vcmp.lt.s32.totalorder %v261, %v262
        %265 = vrot.lane.b32.xlu0 %v255, 96
        %v266 = vpop.permute.xlu0 %265
        %vm267 = vcmask 64512
        %v269 = vsel %vm267, %v258, 0
        %v271 = vsel %vm267, %v266, 0
        %273 = vmatprep.subr.mxu0 0.0
        %274 = vmatpush1.xpose.msra.mxu0 %v271
        %275 = vmatprep.subr.mxu0 0.0
        %276 = vmatpush1.xpose.msra.mxu0 0.0
        %277 = vmatprep.subr.mxu0 0.0
        %278 = vmatpush1.xpose.msra.mxu0 0.0
        %279 = vmatprep.subr.mxu0 0.0
        %280 = vmatpush1.xpose.msra.mxu0 0.0
        %281 = vmatprep.subr.mxu0 0.0
        %282 = vmatpush1.xpose.msra.mxu0 0.0
        %283 = vmatprep.subr.mxu0 0.0
        %284 = vmatpush1.xpose.msra.mxu0 0.0
        %285 = vmatprep.subr.mxu0 0.0
        %286 = vmatpush1.xpose.msra.mxu0 0.0
        %287 = vmatprep.subr.mxu0 0.0
        %288 = vmatpush1.xpose.msra.mxu0 0.0
        %289 = vmatprep.subr.mxu0 0.0
        %290 = vmatpush1.xpose.msra.mxu0 0.0
        %291 = vmatprep.subr.mxu0 0.0
        %292 = vmatpush1.xpose.msra.mxu0 0.0
        %293 = vmatprep.subr.mxu0 0.0
        %294 = vmatpush1.xpose.msra.mxu0 0.0
        %295 = vmatprep.subr.mxu0 0.0
        %296 = vmatpush1.xpose.msra.mxu0 0.0
        %297 = vmatprep.subr.mxu0 0.0
        %298 = vmatpush1.xpose.msra.mxu0 0.0
        %299 = vmatprep.subr.mxu0 0.0
        %300 = vmatpush1.xpose.msra.mxu0 0.0
        %301 = vmatprep.subr.mxu0 0.0
        %302 = vmatpush1.xpose.msra.mxu0 0.0
        %303 = vmatprep.subr.mxu0 0.0
        %304 = vmatpush1.xpose.msra.mxu0 0.0
        %305 = vmatprep.subr.mxu0 0.0
        %306 = vmatpush1.xpose.msra.mxu0 0.0
        %307 = vmatprep.subr.mxu0 0.0
        %308 = vmatpush1.xpose.msra.mxu0 0.0
        %309 = vmatprep.subr.mxu0 0.0
        %310 = vmatpush1.xpose.msra.mxu0 0.0
        %311 = vmatprep.subr.mxu0 0.0
        %312 = vmatpush1.xpose.msra.mxu0 0.0
        %313 = vmatprep.subr.mxu0 0.0
        %314 = vmatpush1.xpose.msra.mxu0 0.0
        %315 = vmatprep.subr.mxu0 0.0
        %316 = vmatpush1.xpose.msra.mxu0 0.0
        %317 = vmatprep.subr.mxu0 0.0
        %318 = vmatpush1.xpose.msra.mxu0 0.0
        %319 = vmatprep.subr.mxu0 0.0
        %320 = vmatpush1.xpose.msra.mxu0 0.0
        %321 = vmatprep.subr.mxu0 0.0
        %322 = vmatpush1.xpose.msra.mxu0 0.0
        %323 = vmatprep.subr.mxu0 0.0
        %324 = vmatpush1.xpose.msra.mxu0 0.0
        %325 = vmatprep.subr.mxu0 0.0
        %326 = vmatpush1.xpose.msra.mxu0 0.0
        %327 = vmatprep.subr.mxu0 0.0
        %328 = vmatpush1.xpose.msra.mxu0 0.0
        %329 = vmatprep.subr.mxu0 0.0
        %330 = vmatpush1.xpose.msra.mxu0 0.0
        %331 = vmatprep.subr.mxu0 0.0
        %332 = vmatpush1.xpose.msra.mxu0 0.0
        %333 = vmatprep.subr.mxu0 0.0
        %334 = vmatpush1.xpose.msra.mxu0 0.0
        %335 = vmatprep.subr.mxu0 0.0
        %336 = vmatpush1.xpose.msra.mxu0 0.0
        %337 = vmatprep.mubr.f32.mxu0 0.0
        %338 = vmatmul.mubr.f32.gmra.mrb[0].mxu0 %v269
        %v339 = vpop.f32.mrb[0].mxu0
        %v340 = vadd.f32 0.0, %v339
        %v341 = vpop.f32.mrb[0].mxu0
        %342 = vdwg.mxu0
        %v343 = vsel %vm263, %v340, -1000000.0
        %v344 = vsel %vm267, %v343, -inf
        %345 = vmax.xlane.f32.xlu0 %v344
        %v346 = vpop.xlane.xlu0 %345
        %v347 = vsub.f32 %v343, %v346
        %v348 = vmul.f32 %v347, 1.442695
        %v349 = vpow.pop %v348
        %v350 = vsel %vm267, %v349, 0.0
        %351 = vadd.xlane.f32.xlu0 %v350
        %v352 = vpop.xlane.xlu0 %351
        %v353 = vrcp.pop %v352
        %v354 = vmul.f32 %v349, %v353
        %355 = vrot.lane.b32.xlu0 %v255, 64
        %v356 = vpop.permute.xlu0 %355
        %v359 = vsel %vm267, %v354, 0
        %361 = vmatprep.subr.mxu0 0.0
        %362 = vmatpush1.msra.mxu0 %v356
        %363 = vmatprep.subr.mxu0 0.0
        %364 = vmatpush1.msra.mxu0 0.0
        %365 = vmatprep.subr.mxu0 0.0
        %366 = vmatpush1.msra.mxu0 0.0
        %367 = vmatprep.subr.mxu0 0.0
        %368 = vmatpush1.msra.mxu0 0.0
        %369 = vmatprep.subr.mxu0 0.0
        %370 = vmatpush1.msra.mxu0 0.0
        %371 = vmatprep.subr.mxu0 0.0
        %372 = vmatpush1.msra.mxu0 0.0
        %373 = vmatprep.subr.mxu0 0.0
        %374 = vmatpush1.msra.mxu0 0.0
        %375 = vmatprep.subr.mxu0 0.0
        %376 = vmatpush1.msra.mxu0 0.0
        %377 = vmatprep.subr.mxu0 0.0
        %378 = vmatpush1.msra.mxu0 0.0
        %379 = vmatprep.subr.mxu0 0.0
        %380 = vmatpush1.msra.mxu0 0.0
        %381 = vmatprep.subr.mxu0 0.0
        %382 = vmatpush1.msra.mxu0 0.0
        %383 = vmatprep.subr.mxu0 0.0
        %384 = vmatpush1.msra.mxu0 0.0
        %385 = vmatprep.subr.mxu0 0.0
        %386 = vmatpush1.msra.mxu0 0.0
        %387 = vmatprep.subr.mxu0 0.0
        %388 = vmatpush1.msra.mxu0 0.0
        %389 = vmatprep.subr.mxu0 0.0
        %390 = vmatpush1.msra.mxu0 0.0
        %391 = vmatprep.subr.mxu0 0.0
        %392 = vmatpush1.msra.mxu0 0.0
        %393 = vmatprep.subr.mxu0 0.0
        %394 = vmatpush1.msra.mxu0 0.0
        %395 = vmatprep.subr.mxu0 0.0
        %396 = vmatpush1.msra.mxu0 0.0
        %397 = vmatprep.subr.mxu0 0.0
        %398 = vmatpush1.msra.mxu0 0.0
        %399 = vmatprep.subr.mxu0 0.0
        %400 = vmatpush1.msra.mxu0 0.0
        %401 = vmatprep.subr.mxu0 0.0
        %402 = vmatpush1.msra.mxu0 0.0
        %403 = vmatprep.subr.mxu0 0.0
        %404 = vmatpush1.msra.mxu0 0.0
        %405 = vmatprep.subr.mxu0 0.0
        %406 = vmatpush1.msra.mxu0 0.0
        %407 = vmatprep.subr.mxu0 0.0
        %408 = vmatpush1.msra.mxu0 0.0
        %409 = vmatprep.subr.mxu0 0.0
        %410 = vmatpush1.msra.mxu0 0.0
        %411 = vmatprep.subr.mxu0 0.0
        %412 = vmatpush1.msra.mxu0 0.0
        %413 = vmatprep.subr.mxu0 0.0
        %414 = vmatpush1.msra.mxu0 0.0
        %415 = vmatprep.subr.mxu0 0.0
        %416 = vmatpush1.msra.mxu0 0.0
        %417 = vmatprep.subr.mxu0 0.0
        %418 = vmatpush1.msra.mxu0 0.0
        %419 = vmatprep.subr.mxu0 0.0
        %420 = vmatpush1.msra.mxu0 0.0
        %421 = vmatprep.subr.mxu0 0.0
        %422 = vmatpush1.msra.mxu0 0.0
        %423 = vmatprep.subr.mxu0 0.0
        %424 = vmatpush1.msra.mxu0 0.0
        %425 = vmatprep.mubr.f32.mxu0 0.0
        %426 = vmatmul.mubr.f32.gmra.mrb[0].mxu0 %v359
        %v427 = vpop.f32.mrb[0].mxu0
        %v428 = vadd.f32 0.0, %v427
        %v429 = vpop.f32.mrb[0].mxu0
        %430 = vdwg.mxu0
        %431 = vrot.lane.b32.xlu0 %v258, 120
        %v432 = vpop.permute.xlu0 %431
        %433 = vrot.lane.b32.xlu0 %v255, 88
        %v434 = vpop.permute.xlu0 %433
        %v435 = vsel %vm267, %v432, 0
        %v437 = vsel %vm267, %v434, 0
        %439 = vmatprep.subr.mxu0 0.0
        %440 = vmatpush1.xpose.msra.mxu0 %v437
        %441 = vmatprep.subr.mxu0 0.0
        %442 = vmatpush1.xpose.msra.mxu0 0.0
        %443 = vmatprep.subr.mxu0 0.0
        %444 = vmatpush1.xpose.msra.mxu0 0.0
        %445 = vmatprep.subr.mxu0 0.0
        %446 = vmatpush1.xpose.msra.mxu0 0.0
        %447 = vmatprep.subr.mxu0 0.0
        %448 = vmatpush1.xpose.msra.mxu0 0.0
        %449 = vmatprep.subr.mxu0 0.0
        %450 = vmatpush1.xpose.msra.mxu0 0.0
        %451 = vmatprep.subr.mxu0 0.0
        %452 = vmatpush1.xpose.msra.mxu0 0.0
        %453 = vmatprep.subr.mxu0 0.0
        %454 = vmatpush1.xpose.msra.mxu0 0.0
        %455 = vmatprep.subr.mxu0 0.0
        %456 = vmatpush1.xpose.msra.mxu0 0.0
        %457 = vmatprep.subr.mxu0 0.0
        %458 = vmatpush1.xpose.msra.mxu0 0.0
        %459 = vmatprep.subr.mxu0 0.0
        %460 = vmatpush1.xpose.msra.mxu0 0.0
        %461 = vmatprep.subr.mxu0 0.0
        %462 = vmatpush1.xpose.msra.mxu0 0.0
        %463 = vmatprep.subr.mxu0 0.0
        %464 = vmatpush1.xpose.msra.mxu0 0.0
        %465 = vmatprep.subr.mxu0 0.0
        %466 = vmatpush1.xpose.msra.mxu0 0.0
        %467 = vmatprep.subr.mxu0 0.0
        %468 = vmatpush1.xpose.msra.mxu0 0.0
        %469 = vmatprep.subr.mxu0 0.0
        %470 = vmatpush1.xpose.msra.mxu0 0.0
        %471 = vmatprep.subr.mxu0 0.0
        %472 = vmatpush1.xpose.msra.mxu0 0.0
        %473 = vmatprep.subr.mxu0 0.0
        %474 = vmatpush1.xpose.msra.mxu0 0.0
        %475 = vmatprep.subr.mxu0 0.0
        %476 = vmatpush1.xpose.msra.mxu0 0.0
        %477 = vmatprep.subr.mxu0 0.0
        %478 = vmatpush1.xpose.msra.mxu0 0.0
        %479 = vmatprep.subr.mxu0 0.0
        %480 = vmatpush1.xpose.msra.mxu0 0.0
        %481 = vmatprep.subr.mxu0 0.0
        %482 = vmatpush1.xpose.msra.mxu0 0.0
        %483 = vmatprep.subr.mxu0 0.0
        %484 = vmatpush1.xpose.msra.mxu0 0.0
        %485 = vmatprep.subr.mxu0 0.0
        %486 = vmatpush1.xpose.msra.mxu0 0.0
        %487 = vmatprep.subr.mxu0 0.0
        %488 = vmatpush1.xpose.msra.mxu0 0.0
        %489 = vmatprep.subr.mxu0 0.0
        %490 = vmatpush1.xpose.msra.mxu0 0.0
        %491 = vmatprep.subr.mxu0 0.0
        %492 = vmatpush1.xpose.msra.mxu0 0.0
        %493 = vmatprep.subr.mxu0 0.0
        %494 = vmatpush1.xpose.msra.mxu0 0.0
        %495 = vmatprep.subr.mxu0 0.0
        %496 = vmatpush1.xpose.msra.mxu0 0.0
        %497 = vmatprep.subr.mxu0 0.0
        %498 = vmatpush1.xpose.msra.mxu0 0.0
        %499 = vmatprep.subr.mxu0 0.0
        %500 = vmatpush1.xpose.msra.mxu0 0.0
        %501 = vmatprep.subr.mxu0 0.0
        %502 = vmatpush1.xpose.msra.mxu0 0.0
        %503 = vmatprep.mubr.f32.mxu0 0.0
        %504 = vmatmul.mubr.f32.gmra.mrb[0].mxu0 %v435
        %v505 = vpop.f32.mrb[0].mxu0
        %v506 = vadd.f32 0.0, %v505
        %v507 = vpop.f32.mrb[0].mxu0
        %508 = vdwg.mxu0
        %v509 = vsel %vm263, %v506, -1000000.0
        %v510 = vsel %vm267, %v509, -inf
        %511 = vmax.xlane.f32.xlu0 %v510
        %v512 = vpop.xlane.xlu0 %511
        %v513 = vsub.f32 %v509, %v512
        %v514 = vmul.f32 %v513, 1.442695
        %v515 = vpow.pop %v514
        %v516 = vsel %vm267, %v515, 0.0
        %517 = vadd.xlane.f32.xlu0 %v516
        %v518 = vpop.xlane.xlu0 %517
        %v519 = vrcp.pop %v518
        %v520 = vmul.f32 %v515, %v519
        %521 = vrot.lane.b32.xlu0 %v255, 56
        %v522 = vpop.permute.xlu0 %521
        %v525 = vsel %vm267, %v520, 0
        %527 = vmatprep.subr.mxu0 0.0
        %528 = vmatpush1.msra.mxu0 %v522
        %529 = vmatprep.subr.mxu0 0.0
        %530 = vmatpush1.msra.mxu0 0.0
        %531 = vmatprep.subr.mxu0 0.0
        %532 = vmatpush1.msra.mxu0 0.0
        %533 = vmatprep.subr.mxu0 0.0
        %534 = vmatpush1.msra.mxu0 0.0
        %535 = vmatprep.subr.mxu0 0.0
        %536 = vmatpush1.msra.mxu0 0.0
        %537 = vmatprep.subr.mxu0 0.0
        %538 = vmatpush1.msra.mxu0 0.0
        %539 = vmatprep.subr.mxu0 0.0
        %540 = vmatpush1.msra.mxu0 0.0
        %541 = vmatprep.subr.mxu0 0.0
        %542 = vmatpush1.msra.mxu0 0.0
        %543 = vmatprep.subr.mxu0 0.0
        %544 = vmatpush1.msra.mxu0 0.0
        %545 = vmatprep.subr.mxu0 0.0
        %546 = vmatpush1.msra.mxu0 0.0
        %547 = vmatprep.subr.mxu0 0.0
        %548 = vmatpush1.msra.mxu0 0.0
        %549 = vmatprep.subr.mxu0 0.0
        %550 = vmatpush1.msra.mxu0 0.0
        %551 = vmatprep.subr.mxu0 0.0
        %552 = vmatpush1.msra.mxu0 0.0
        %553 = vmatprep.subr.mxu0 0.0
        %554 = vmatpush1.msra.mxu0 0.0
        %555 = vmatprep.subr.mxu0 0.0
        %556 = vmatpush1.msra.mxu0 0.0
        %557 = vmatprep.subr.mxu0 0.0
        %558 = vmatpush1.msra.mxu0 0.0
        %559 = vmatprep.subr.mxu0 0.0
        %560 = vmatpush1.msra.mxu0 0.0
        %561 = vmatprep.subr.mxu0 0.0
        %562 = vmatpush1.msra.mxu0 0.0
        %563 = vmatprep.subr.mxu0 0.0
        %564 = vmatpush1.msra.mxu0 0.0
        %565 = vmatprep.subr.mxu0 0.0
        %566 = vmatpush1.msra.mxu0 0.0
        %567 = vmatprep.subr.mxu0 0.0
        %568 = vmatpush1.msra.mxu0 0.0
        %569 = vmatprep.subr.mxu0 0.0
        %570 = vmatpush1.msra.mxu0 0.0
        %571 = vmatprep.subr.mxu0 0.0
        %572 = vmatpush1.msra.mxu0 0.0
        %573 = vmatprep.subr.mxu0 0.0
        %574 = vmatpush1.msra.mxu0 0.0
        %575 = vmatprep.subr.mxu0 0.0
        %576 = vmatpush1.msra.mxu0 0.0
        %577 = vmatprep.subr.mxu0 0.0
        %578 = vmatpush1.msra.mxu0 0.0
        %579 = vmatprep.subr.mxu0 0.0
        %580 = vmatpush1.msra.mxu0 0.0
        %581 = vmatprep.subr.mxu0 0.0
        %582 = vmatpush1.msra.mxu0 0.0
        %583 = vmatprep.subr.mxu0 0.0
        %584 = vmatpush1.msra.mxu0 0.0
        %585 = vmatprep.subr.mxu0 0.0
        %586 = vmatpush1.msra.mxu0 0.0
        %587 = vmatprep.subr.mxu0 0.0
        %588 = vmatpush1.msra.mxu0 0.0
        %589 = vmatprep.subr.mxu0 0.0
        %590 = vmatpush1.msra.mxu0 0.0
        %591 = vmatprep.mubr.f32.mxu0 0.0
        %592 = vmatmul.mubr.f32.gmra.mrb[0].mxu0 %v525
        %v593 = vpop.f32.mrb[0].mxu0
        %v594 = vadd.f32 0.0, %v593
        %v595 = vpop.f32.mrb[0].mxu0
        %596 = vdwg.mxu0
        %597 = vrot.lane.b32.xlu0 %v258, 112
        %v598 = vpop.permute.xlu0 %597
        %599 = vrot.lane.b32.xlu0 %v255, 80
        %v600 = vpop.permute.xlu0 %599
        %v601 = vsel %vm267, %v598, 0
        %v603 = vsel %vm267, %v600, 0
        %605 = vmatprep.subr.mxu0 0.0
        %606 = vmatpush1.xpose.msra.mxu0 %v603
        %607 = vmatprep.subr.mxu0 0.0
        %608 = vmatpush1.xpose.msra.mxu0 0.0
        %609 = vmatprep.subr.mxu0 0.0
        %610 = vmatpush1.xpose.msra.mxu0 0.0
        %611 = vmatprep.subr.mxu0 0.0
        %612 = vmatpush1.xpose.msra.mxu0 0.0
        %613 = vmatprep.subr.mxu0 0.0
        %614 = vmatpush1.xpose.msra.mxu0 0.0
        %615 = vmatprep.subr.mxu0 0.0
        %616 = vmatpush1.xpose.msra.mxu0 0.0
        %617 = vmatprep.subr.mxu0 0.0
        %618 = vmatpush1.xpose.msra.mxu0 0.0
        %619 = vmatprep.subr.mxu0 0.0
        %620 = vmatpush1.xpose.msra.mxu0 0.0
        %621 = vmatprep.subr.mxu0 0.0
        %622 = vmatpush1.xpose.msra.mxu0 0.0
        %623 = vmatprep.subr.mxu0 0.0
        %624 = vmatpush1.xpose.msra.mxu0 0.0
        %625 = vmatprep.subr.mxu0 0.0
        %626 = vmatpush1.xpose.msra.mxu0 0.0
        %627 = vmatprep.subr.mxu0 0.0
        %628 = vmatpush1.xpose.msra.mxu0 0.0
        %629 = vmatprep.subr.mxu0 0.0
        %630 = vmatpush1.xpose.msra.mxu0 0.0
        %631 = vmatprep.subr.mxu0 0.0
        %632 = vmatpush1.xpose.msra.mxu0 0.0
        %633 = vmatprep.subr.mxu0 0.0
        %634 = vmatpush1.xpose.msra.mxu0 0.0
        %635 = vmatprep.subr.mxu0 0.0
        %636 = vmatpush1.xpose.msra.mxu0 0.0
        %637 = vmatprep.subr.mxu0 0.0
        %638 = vmatpush1.xpose.msra.mxu0 0.0
        %639 = vmatprep.subr.mxu0 0.0
        %640 = vmatpush1.xpose.msra.mxu0 0.0
        %641 = vmatprep.subr.mxu0 0.0
        %642 = vmatpush1.xpose.msra.mxu0 0.0
        %643 = vmatprep.subr.mxu0 0.0
        %644 = vmatpush1.xpose.msra.mxu0 0.0
        %645 = vmatprep.subr.mxu0 0.0
        %646 = vmatpush1.xpose.msra.mxu0 0.0
        %647 = vmatprep.subr.mxu0 0.0
        %648 = vmatpush1.xpose.msra.mxu0 0.0
        %649 = vmatprep.subr.mxu0 0.0
        %650 = vmatpush1.xpose.msra.mxu0 0.0
        %651 = vmatprep.subr.mxu0 0.0
        %652 = vmatpush1.xpose.msra.mxu0 0.0
        %653 = vmatprep.subr.mxu0 0.0
        %654 = vmatpush1.xpose.msra.mxu0 0.0
        %655 = vmatprep.subr.mxu0 0.0
        %656 = vmatpush1.xpose.msra.mxu0 0.0
        %657 = vmatprep.subr.mxu0 0.0
        %658 = vmatpush1.xpose.msra.mxu0 0.0
        %659 = vmatprep.subr.mxu0 0.0
        %660 = vmatpush1.xpose.msra.mxu0 0.0
        %661 = vmatprep.subr.mxu0 0.0
        %662 = vmatpush1.xpose.msra.mxu0 0.0
        %663 = vmatprep.subr.mxu0 0.0
        %664 = vmatpush1.xpose.msra.mxu0 0.0
        %665 = vmatprep.subr.mxu0 0.0
        %666 = vmatpush1.xpose.msra.mxu0 0.0
        %667 = vmatprep.subr.mxu0 0.0
        %668 = vmatpush1.xpose.msra.mxu0 0.0
        %669 = vmatprep.mubr.f32.mxu0 0.0
        %670 = vmatmul.mubr.f32.gmra.mrb[0].mxu0 %v601
        %v671 = vpop.f32.mrb[0].mxu0
        %v672 = vadd.f32 0.0, %v671
        %v673 = vpop.f32.mrb[0].mxu0
        %674 = vdwg.mxu0
        %v675 = vsel %vm263, %v672, -1000000.0
        %v676 = vsel %vm267, %v675, -inf
        %677 = vmax.xlane.f32.xlu0 %v676
        %v678 = vpop.xlane.xlu0 %677
        %v679 = vsub.f32 %v675, %v678
        %v680 = vmul.f32 %v679, 1.442695
        %v681 = vpow.pop %v680
        %v682 = vsel %vm267, %v681, 0.0
        %683 = vadd.xlane.f32.xlu0 %v682
        %v684 = vpop.xlane.xlu0 %683
        %v685 = vrcp.pop %v684
        %v686 = vmul.f32 %v681, %v685
        %687 = vrot.lane.b32.xlu0 %v255, 48
        %v688 = vpop.permute.xlu0 %687
        %v691 = vsel %vm267, %v686, 0
        %693 = vmatprep.subr.mxu0 0.0
        %694 = vmatpush1.msra.mxu0 %v688
        %695 = vmatprep.subr.mxu0 0.0
        %696 = vmatpush1.msra.mxu0 0.0
        %697 = vmatprep.subr.mxu0 0.0
        %698 = vmatpush1.msra.mxu0 0.0
        %699 = vmatprep.subr.mxu0 0.0
        %700 = vmatpush1.msra.mxu0 0.0
        %701 = vmatprep.subr.mxu0 0.0
        %702 = vmatpush1.msra.mxu0 0.0
        %703 = vmatprep.subr.mxu0 0.0
        %704 = vmatpush1.msra.mxu0 0.0
        %705 = vmatprep.subr.mxu0 0.0
        %706 = vmatpush1.msra.mxu0 0.0
        %707 = vmatprep.subr.mxu0 0.0
        %708 = vmatpush1.msra.mxu0 0.0
        %709 = vmatprep.subr.mxu0 0.0
        %710 = vmatpush1.msra.mxu0 0.0
        %711 = vmatprep.subr.mxu0 0.0
        %712 = vmatpush1.msra.mxu0 0.0
        %713 = vmatprep.subr.mxu0 0.0
        %714 = vmatpush1.msra.mxu0 0.0
        %715 = vmatprep.subr.mxu0 0.0
        %716 = vmatpush1.msra.mxu0 0.0
        %717 = vmatprep.subr.mxu0 0.0
        %718 = vmatpush1.msra.mxu0 0.0
        %719 = vmatprep.subr.mxu0 0.0
        %720 = vmatpush1.msra.mxu0 0.0
        %721 = vmatprep.subr.mxu0 0.0
        %722 = vmatpush1.msra.mxu0 0.0
        %723 = vmatprep.subr.mxu0 0.0
        %724 = vmatpush1.msra.mxu0 0.0
        %725 = vmatprep.subr.mxu0 0.0
        %726 = vmatpush1.msra.mxu0 0.0
        %727 = vmatprep.subr.mxu0 0.0
        %728 = vmatpush1.msra.mxu0 0.0
        %729 = vmatprep.subr.mxu0 0.0
        %730 = vmatpush1.msra.mxu0 0.0
        %731 = vmatprep.subr.mxu0 0.0
        %732 = vmatpush1.msra.mxu0 0.0
        %733 = vmatprep.subr.mxu0 0.0
        %734 = vmatpush1.msra.mxu0 0.0
        %735 = vmatprep.subr.mxu0 0.0
        %736 = vmatpush1.msra.mxu0 0.0
        %737 = vmatprep.subr.mxu0 0.0
        %738 = vmatpush1.msra.mxu0 0.0
        %739 = vmatprep.subr.mxu0 0.0
        %740 = vmatpush1.msra.mxu0 0.0
        %741 = vmatprep.subr.mxu0 0.0
        %742 = vmatpush1.msra.mxu0 0.0
        %743 = vmatprep.subr.mxu0 0.0
        %744 = vmatpush1.msra.mxu0 0.0
        %745 = vmatprep.subr.mxu0 0.0
        %746 = vmatpush1.msra.mxu0 0.0
        %747 = vmatprep.subr.mxu0 0.0
        %748 = vmatpush1.msra.mxu0 0.0
        %749 = vmatprep.subr.mxu0 0.0
        %750 = vmatpush1.msra.mxu0 0.0
        %751 = vmatprep.subr.mxu0 0.0
        %752 = vmatpush1.msra.mxu0 0.0
        %753 = vmatprep.subr.mxu0 0.0
        %754 = vmatpush1.msra.mxu0 0.0
        %755 = vmatprep.subr.mxu0 0.0
        %756 = vmatpush1.msra.mxu0 0.0
        %757 = vmatprep.mubr.f32.mxu0 0.0
        %758 = vmatmul.mubr.f32.gmra.mrb[0].mxu0 %v691
        %v759 = vpop.f32.mrb[0].mxu0
        %v760 = vadd.f32 0.0, %v759
        %v761 = vpop.f32.mrb[0].mxu0
        %762 = vdwg.mxu0
        %763 = vrot.lane.b32.xlu0 %v258, 104
        %v764 = vpop.permute.xlu0 %763
        %765 = vrot.lane.b32.xlu0 %v255, 72
        %v766 = vpop.permute.xlu0 %765
        %v767 = vsel %vm267, %v764, 0
        %v769 = vsel %vm267, %v766, 0
        %771 = vmatprep.subr.mxu0 0.0
        %772 = vmatpush1.xpose.msra.mxu0 %v769
        %773 = vmatprep.subr.mxu0 0.0
        %774 = vmatpush1.xpose.msra.mxu0 0.0
        %775 = vmatprep.subr.mxu0 0.0
        %776 = vmatpush1.xpose.msra.mxu0 0.0
        %777 = vmatprep.subr.mxu0 0.0
        %778 = vmatpush1.xpose.msra.mxu0 0.0
        %779 = vmatprep.subr.mxu0 0.0
        %780 = vmatpush1.xpose.msra.mxu0 0.0
        %781 = vmatprep.subr.mxu0 0.0
        %782 = vmatpush1.xpose.msra.mxu0 0.0
        %783 = vmatprep.subr.mxu0 0.0
        %784 = vmatpush1.xpose.msra.mxu0 0.0
        %785 = vmatprep.subr.mxu0 0.0
        %786 = vmatpush1.xpose.msra.mxu0 0.0
        %787 = vmatprep.subr.mxu0 0.0
        %788 = vmatpush1.xpose.msra.mxu0 0.0
        %789 = vmatprep.subr.mxu0 0.0
        %790 = vmatpush1.xpose.msra.mxu0 0.0
        %791 = vmatprep.subr.mxu0 0.0
        %792 = vmatpush1.xpose.msra.mxu0 0.0
        %793 = vmatprep.subr.mxu0 0.0
        %794 = vmatpush1.xpose.msra.mxu0 0.0
        %795 = vmatprep.subr.mxu0 0.0
        %796 = vmatpush1.xpose.msra.mxu0 0.0
        %797 = vmatprep.subr.mxu0 0.0
        %798 = vmatpush1.xpose.msra.mxu0 0.0
        %799 = vmatprep.subr.mxu0 0.0
        %800 = vmatpush1.xpose.msra.mxu0 0.0
        %801 = vmatprep.subr.mxu0 0.0
        %802 = vmatpush1.xpose.msra.mxu0 0.0
        %803 = vmatprep.subr.mxu0 0.0
        %804 = vmatpush1.xpose.msra.mxu0 0.0
        %805 = vmatprep.subr.mxu0 0.0
        %806 = vmatpush1.xpose.msra.mxu0 0.0
        %807 = vmatprep.subr.mxu0 0.0
        %808 = vmatpush1.xpose.msra.mxu0 0.0
        %809 = vmatprep.subr.mxu0 0.0
        %810 = vmatpush1.xpose.msra.mxu0 0.0
        %811 = vmatprep.subr.mxu0 0.0
        %812 = vmatpush1.xpose.msra.mxu0 0.0
        %813 = vmatprep.subr.mxu0 0.0
        %814 = vmatpush1.xpose.msra.mxu0 0.0
        %815 = vmatprep.subr.mxu0 0.0
        %816 = vmatpush1.xpose.msra.mxu0 0.0
        %817 = vmatprep.subr.mxu0 0.0
        %818 = vmatpush1.xpose.msra.mxu0 0.0
        %819 = vmatprep.subr.mxu0 0.0
        %820 = vmatpush1.xpose.msra.mxu0 0.0
        %821 = vmatprep.subr.mxu0 0.0
        %822 = vmatpush1.xpose.msra.mxu0 0.0
        %823 = vmatprep.subr.mxu0 0.0
        %824 = vmatpush1.xpose.msra.mxu0 0.0
        %825 = vmatprep.subr.mxu0 0.0
        %826 = vmatpush1.xpose.msra.mxu0 0.0
        %827 = vmatprep.subr.mxu0 0.0
        %828 = vmatpush1.xpose.msra.mxu0 0.0
        %829 = vmatprep.subr.mxu0 0.0
        %830 = vmatpush1.xpose.msra.mxu0 0.0
        %831 = vmatprep.subr.mxu0 0.0
        %832 = vmatpush1.xpose.msra.mxu0 0.0
        %833 = vmatprep.subr.mxu0 0.0
        %834 = vmatpush1.xpose.msra.mxu0 0.0
        %835 = vmatprep.mubr.f32.mxu0 0.0
        %836 = vmatmul.mubr.f32.gmra.mrb[0].mxu0 %v767
        %v837 = vpop.f32.mrb[0].mxu0
        %v838 = vadd.f32 0.0, %v837
        %v839 = vpop.f32.mrb[0].mxu0
        %840 = vdwg.mxu0
        %v841 = vsel %vm263, %v838, -1000000.0
        %v842 = vsel %vm267, %v841, -inf
        %843 = vmax.xlane.f32.xlu0 %v842
        %v844 = vpop.xlane.xlu0 %843
        %v845 = vsub.f32 %v841, %v844
        %v846 = vmul.f32 %v845, 1.442695
        %v847 = vpow.pop %v846
        %v848 = vsel %vm267, %v847, 0.0
        %849 = vadd.xlane.f32.xlu0 %v848
        %v850 = vpop.xlane.xlu0 %849
        %v851 = vrcp.pop %v850
        %v852 = vmul.f32 %v847, %v851
        %853 = vrot.lane.b32.xlu0 %v255, 40
        %v854 = vpop.permute.xlu0 %853
        %v857 = vsel %vm267, %v852, 0
        %859 = vmatprep.subr.mxu0 0.0
        %860 = vmatpush1.msra.mxu0 %v854
        %861 = vmatprep.subr.mxu0 0.0
        %862 = vmatpush1.msra.mxu0 0.0
        %863 = vmatprep.subr.mxu0 0.0
        %864 = vmatpush1.msra.mxu0 0.0
        %865 = vmatprep.subr.mxu0 0.0
        %866 = vmatpush1.msra.mxu0 0.0
        %867 = vmatprep.subr.mxu0 0.0
        %868 = vmatpush1.msra.mxu0 0.0
        %869 = vmatprep.subr.mxu0 0.0
        %870 = vmatpush1.msra.mxu0 0.0
        %871 = vmatprep.subr.mxu0 0.0
        %872 = vmatpush1.msra.mxu0 0.0
        %873 = vmatprep.subr.mxu0 0.0
        %874 = vmatpush1.msra.mxu0 0.0
        %875 = vmatprep.subr.mxu0 0.0
        %876 = vmatpush1.msra.mxu0 0.0
        %877 = vmatprep.subr.mxu0 0.0
        %878 = vmatpush1.msra.mxu0 0.0
        %879 = vmatprep.subr.mxu0 0.0
        %880 = vmatpush1.msra.mxu0 0.0
        %881 = vmatprep.subr.mxu0 0.0
        %882 = vmatpush1.msra.mxu0 0.0
        %883 = vmatprep.subr.mxu0 0.0
        %884 = vmatpush1.msra.mxu0 0.0
        %885 = vmatprep.subr.mxu0 0.0
        %886 = vmatpush1.msra.mxu0 0.0
        %887 = vmatprep.subr.mxu0 0.0
        %888 = vmatpush1.msra.mxu0 0.0
        %889 = vmatprep.subr.mxu0 0.0
        %890 = vmatpush1.msra.mxu0 0.0
        %891 = vmatprep.subr.mxu0 0.0
        %892 = vmatpush1.msra.mxu0 0.0
        %893 = vmatprep.subr.mxu0 0.0
        %894 = vmatpush1.msra.mxu0 0.0
        %895 = vmatprep.subr.mxu0 0.0
        %896 = vmatpush1.msra.mxu0 0.0
        %897 = vmatprep.subr.mxu0 0.0
        %898 = vmatpush1.msra.mxu0 0.0
        %899 = vmatprep.subr.mxu0 0.0
        %900 = vmatpush1.msra.mxu0 0.0
        %901 = vmatprep.subr.mxu0 0.0
        %902 = vmatpush1.msra.mxu0 0.0
        %903 = vmatprep.subr.mxu0 0.0
        %904 = vmatpush1.msra.mxu0 0.0
        %905 = vmatprep.subr.mxu0 0.0
        %906 = vmatpush1.msra.mxu0 0.0
        %907 = vmatprep.subr.mxu0 0.0
        %908 = vmatpush1.msra.mxu0 0.0
        %909 = vmatprep.subr.mxu0 0.0
        %910 = vmatpush1.msra.mxu0 0.0
        %911 = vmatprep.subr.mxu0 0.0
        %912 = vmatpush1.msra.mxu0 0.0
        %913 = vmatprep.subr.mxu0 0.0
        %914 = vmatpush1.msra.mxu0 0.0
        %915 = vmatprep.subr.mxu0 0.0
        %916 = vmatpush1.msra.mxu0 0.0
        %917 = vmatprep.subr.mxu0 0.0
        %918 = vmatpush1.msra.mxu0 0.0
        %919 = vmatprep.subr.mxu0 0.0
        %920 = vmatpush1.msra.mxu0 0.0
        %921 = vmatprep.subr.mxu0 0.0
        %922 = vmatpush1.msra.mxu0 0.0
        %923 = vmatprep.mubr.f32.mxu0 0.0
        %924 = vmatmul.mubr.f32.gmra.mrb[0].mxu0 %v857
        %v925 = vpop.f32.mrb[0].mxu0
        %v926 = vadd.f32 0.0, %v925
        %v927 = vpop.f32.mrb[0].mxu0
        %928 = vdwg.mxu0
        %930 = vrot.lane.b32.xlu0 %v594, 8
        %v931 = vpop.permute.xlu0 %930
        %934 = vrot.lane.b32.xlu0 %v760, 16
        %v935 = vpop.permute.xlu0 %934
        %938 = vrot.lane.b32.xlu0 %v926, 24
        %v939 = vpop.permute.xlu0 %938
        %v941 = vsel %vm267, %v428, %v931
        %vm942 = vcmask 130048
        %v943 = vsel %vm942, %v941, %v935
        %vm944 = vcmask 195584
        %v945 = vsel %vm944, %v943, %v939
        %946 = vst.msk [vmem:[%s178] sm:$0xff] %vm184, %v945
        %s947 = sand.u32 %s80, 1
        %s948 = scalar_lea.sflag [#allocation6], %s947
        %s949 = sand.u32 %s80, 1
        %s950 = smul.addr %s949, 8
        %s951 = scalar_lea.vmem [#allocation9], %s950
        // Predicated region
        $region37: #{tpu_custom_call.1} parent=27 // pred_check
          %p952 = pneg %p90
        $region38: #{tpu_custom_call.1} parent=27 // pred_check_branch
          %954 = sbr.rel (%p952) target = $region40
        $region39: #{tpu_custom_call.1} parent=27 // pred_region
          %s956 = ssub.s32 128, 128
          %957 = vsyncadd %s948, %s956
          %s958 = smul.addr %s25, 128
          %s959 = scalar_lea.hbm %s3, %s958
          %s961 = sshll.u32 %s951, 4
          %s962 = int_to_ptr.vmem [resolvable:$true] %s961
          %964 = dma.vmem_to_hbm [thread:$0]  %s962, 128, %s959, %s948
        $region40: #{tpu_custom_call.1} parent=27 // pred_fallthru
          _
      $region28: #{tpu_custom_call.1} parent=5 // pred_fallthru
        _
      %p965 = scmp.le.s32.totalorder 2, %s20
      // Predicated region
      $region41: #{tpu_custom_call.1} parent=5 // pred_check
        %p966 = pneg %p965
      $region42: #{tpu_custom_call.1} parent=5 // pred_check_branch
        %968 = sbr.rel (%p966) target = $region44
      $region43: #{tpu_custom_call.1} parent=5 // pred_region
        %s969 = ssub.s32 %s20, 2
        // Predicated region
        $region45: #{tpu_custom_call.1} parent=43 // pred_check
          %p970 = pneg %p96
        $region46: #{tpu_custom_call.1} parent=43 // pred_check_branch
          %972 = sbr.rel (%p970) target = $region48
        $region47: #{tpu_custom_call.1} parent=43 // pred_region
          %s973 = sand.u32 %s81, 1
          %s974 = scalar_lea.sflag [#allocation6], %s973
          %s975 = sand.u32 %s81, 1
          %s976 = smul.addr %s975, 8
          %s977 = scalar_lea.vmem [#allocation9], %s976
          %978 = dma.done %s974, 128
        $region48: #{tpu_custom_call.1} parent=43 // pred_fallthru
          _
      $region44: #{tpu_custom_call.1} parent=5 // pred_fallthru
        _
    $region6: #{tpu_custom_call.1} parent=1 // loop_footer
      %s24 = sadd.s32 1, %s20
    $region7: #{tpu_custom_call.1} parent=1 // loop_footer_branch
      %19 = sbr.rel target = $region3
    $region8: #{tpu_custom_call.1} parent=1 // loop_exit
      _
    %979 = vsyncpa [#allocation5], 1
    %s980 = scalar_lea.sflag [#allocation5], 1
    %981 = vsyncpa %s980, 1
    %982 = vsyncpa [#allocation8], 1
    %983 = vsyncpa [#allocation6], 1
    %s984 = scalar_lea.sflag [#allocation6], 1
    %985 = vsyncpa %s984, 1

</llo_original>
